<compile_context>
chip_gen: v7x
topology: tpu7x:2x2x1
jax: 0.10.0
libtpu: 0.0.40
codegen_flags: <defaults>
</compile_context>

<pallas_src>
import functools

import jax
import jax.numpy as jnp
from jax.experimental import pallas as pl
from jax.experimental.pallas import tpu as pltpu

LANE = 128       # TPU lane width
SUB = 8          # f32 sublane multiple
HIDDEN = 1024    # fixed by the module
HK = 256         # hidden-dim chunk processed per MXU pass inside the kernel


def _round_up(x, m):
    return ((x + m - 1) // m) * m


def _make_mlp_kernel(hk):
    """Fused MLP kernel, hidden dim chunked by `hk` (static)."""

    def kernel(x_ref, w1_ref, w2_ref, o_ref, acc_ref):
        # Cast activations to bf16 in-kernel (VPU op, hidden under the MXU).
        x = x_ref[...].astype(jnp.bfloat16)
        hdim = w1_ref.shape[1]
        n_chunks = hdim // hk
        for ki in range(n_chunks):
            k = ki * hk
            # (TB, D) bf16 @ (D, hk) bf16 -> f32 on the MXU.
            h = jnp.dot(x, w1_ref[:, pl.ds(k, hk)],
                        preferred_element_type=jnp.float32)
            # LeakyReLU, PyTorch default negative_slope = 0.01 (f32, one VALU op).
            h = jnp.maximum(h, 0.01 * h)
            # (TB, hk) bf16 @ (hk, C_pad) bf16 -> f32; accumulate over chunks.
            p = jnp.dot(h.astype(jnp.bfloat16), w2_ref[pl.ds(k, hk), :],
                        preferred_element_type=jnp.float32)
            if ki == 0:
                acc_ref[...] = p
            else:
                acc_ref[...] = acc_ref[...] + p
        # Lane-dense, unmasked store.
        o_ref[...] = acc_ref[...].astype(o_ref.dtype)

    return kernel


def prepare_weights(w1, w2):
    """One-time weight preparation (do this OUTSIDE the per-call hot path).

    w1: (latent_dim, 1024) f32   (transposed vs. PyTorch nn.Linear.weight)
    w2: (1024, n_classes) f32    (transposed vs. PyTorch nn.Linear.weight)
    Returns bf16 w1 and bf16 w2 zero-padded to a 128-lane-dense class dim.
    """
    H, C = w2.shape
    C_pad = _round_up(C, LANE)
    w1_b = w1.astype(jnp.bfloat16)
    if C_pad == C:
        w2_p = w2.astype(jnp.bfloat16)
    else:
        w2_p = jnp.zeros((H, C_pad), jnp.bfloat16).at[:, :C].set(
            w2.astype(jnp.bfloat16))
    return w1_b, w2_p


def small_homo_classifier2_forward(x, w1_b, w2_p, n_classes, *,
                                   block_b=1024, out_dtype=jnp.float32):
    """Fused MLP forward with pre-prepared weights (see prepare_weights).

    x    : (B, latent_dim) f32
    w1_b : (latent_dim, 1024) bf16
    w2_p : (1024, C_pad) bf16, C_pad multiple of 128, first n_classes cols real
    returns (B, n_classes) in out_dtype (f32 default; bf16 optional for v6e).
    """
    B, D = x.shape
    Din, H = w1_b.shape
    H2, C_pad = w2_p.shape
    assert Din == D and H2 == H
    assert C_pad % LANE == 0 and n_classes <= C_pad

    # Pad batch only to the f32 sublane multiple (usually a no-op; never to TB).
    if B % SUB:
        B_pad = _round_up(B, SUB)
        x_p = jnp.zeros((B_pad, D), x.dtype).at[:B].set(x)
    else:
        B_pad, x_p = B, x

    # Batch tile: at least 2 grid steps when possible so the "parallel" axis can
    # shard across both TensorCores on v7x; cap at block_b for VMEM headroom.
    # Ragged last tile (B_pad not a multiple of TB) is handled by Pallas: rows are
    # independent and out-of-range output rows are masked on writeback.
    TB = min(block_b, max(SUB, _round_up(pl.cdiv(B_pad, 2), SUB)))
    grid = (pl.cdiv(B_pad, TB),)

    hk = HK if H % HK == 0 else H
    kernel = _make_mlp_kernel(hk)

    out_padded = pl.pallas_call(
        kernel,
        out_shape=jax.ShapeDtypeStruct((B_pad, C_pad), out_dtype),
        grid=grid,
        in_specs=[
            pl.BlockSpec((TB, D), lambda i: (i, 0)),    # x streams over batch
            pl.BlockSpec((D, H), lambda i: (0, 0)),     # w1 resident
            pl.BlockSpec((H, C_pad), lambda i: (0, 0)), # w2 resident
        ],
        out_specs=pl.BlockSpec((TB, C_pad), lambda i: (i, 0)),
        scratch_shapes=[pltpu.VMEM((TB, C_pad), jnp.float32)],  # f32 accumulator
        compiler_params=pltpu.CompilerParams(
            dimension_semantics=("parallel",)),         # megacore sharding on v7x
    )(x_p, w1_b, w2_p)

    return out_padded[:B, :n_classes]


def small_homo_classifier2(x, w1, w2, **kw):
    """Convenience end-to-end path (prepares weights per call; prefer caching)."""
    w1_b, w2_p = prepare_weights(w1, w2)
    return small_homo_classifier2_forward(x, w1_b, w2_p, w2.shape[1], **kw)


def init_params(key, latent_dim, n_classes, hidden=HIDDEN):
    """PyTorch nn.Linear default init (U[-1/sqrt(fan_in), 1/sqrt(fan_in)]), no biases."""
    k1, k2 = jax.random.split(key, 2)
    bound1 = 1.0 / jnp.sqrt(latent_dim)
    bound2 = 1.0 / jnp.sqrt(hidden)
    w1 = jax.random.uniform(k1, (latent_dim, hidden), jnp.float32, -bound1, bound1)
    w2 = jax.random.uniform(k2, (hidden, n_classes), jnp.float32, -bound2, bound2)
    return w1, w2


if __name__ == "__main__":
    latent_dim = 32
    n_classes = 10

    key = jax.random.PRNGKey(0)
    k_x, k_p = jax.random.split(key)
    w1, w2 = init_params(k_p, latent_dim, n_classes)

    # One-time weight preparation outside the jitted hot path.
    w1_b, w2_p = prepare_weights(w1, w2)

    fwd = jax.jit(functools.partial(small_homo_classifier2_forward,
                                    n_classes=n_classes))

    def ref_bf16(x):
        # Same numerics as the kernel (bf16 matmul inputs, f32 accumulation).
        h = jnp.dot(x.astype(jnp.bfloat16), w1.astype(jnp.bfloat16),
                    preferred_element_type=jnp.float32)
        h = jnp.where(h > 0, h, 0.01 * h)
        return jnp.dot(h.astype(jnp.bfloat16), w2.astype(jnp.bfloat16),
                       preferred_element_type=jnp.float32)

    def ref_f32(x):
        # Full-f32 semantics of the PyTorch module (loose tolerance; only
        # difference is the intentional bf16 MXU-input cast).
        h = x @ w1
        h = jnp.where(h > 0, h, 0.01 * h)
        return h @ w2

    # batch=8: single aligned tile.  batch=37: exercises sublane pad + ragged tile.
    for batch in (8, 37):
        x = jax.random.normal(jax.random.fold_in(k_x, batch),
                              (batch, latent_dim), jnp.float32)
        out = jax.block_until_ready(fwd(x, w1_b, w2_p))
        assert out.shape == (batch, n_classes)
        assert jnp.allclose(out, ref_bf16(x), atol=2e-3, rtol=2e-3)
        assert jnp.allclose(out, ref_f32(x), atol=1e-1, rtol=1e-1)

    print("KERNEL_OK")
</pallas_src>

<mosaic_0001>
module attributes {stable_mosaic.version = 11 : i64} {
  func.func @kernel(%arg0: i32, %arg1: memref<8x32xf32, #tpu.memory_space<vmem>>, %arg2: memref<32x1024xbf16, #tpu.memory_space<vmem>>, %arg3: memref<1024x128xbf16, #tpu.memory_space<vmem>>, %arg4: memref<8x128xf32, #tpu.memory_space<vmem>>, %arg5: memref<8x128xf32, #tpu.memory_space<vmem>>) attributes {dimension_semantics = [#tpu.dimension_semantics<parallel>], iteration_bounds = array<i64: 1>, scalar_prefetch = 0 : i64, scratch_operands = 1 : i64, tpu.core_type = #tpu.core_type<tc>, window_params = [{transform_indices = @transform_0, window_bounds = array<i64: 8, 32>}, {pipeline_mode = #tpu.pipeline_mode<synchronous>, transform_indices = @transform_1, window_bounds = array<i64: 32, 1024>}, {pipeline_mode = #tpu.pipeline_mode<synchronous>, transform_indices = @transform_2, window_bounds = array<i64: 1024, 128>}, {transform_indices = @transform_3, window_bounds = array<i64: 8, 128>}]} {
    %c0 = arith.constant 0 : index
    %c0_0 = arith.constant 0 : index
    %0 = vector.load %arg1[%c0, %c0_0] : memref<8x32xf32, #tpu.memory_space<vmem>>, vector<8x32xf32>
    %1 = arith.truncf %0 : vector<8x32xf32> to vector<8x32xbf16>
    %c0_1 = arith.constant 0 : index
    %c0_2 = arith.constant 0 : index
    %2 = vector.load %arg2[%c0_1, %c0_2] : memref<32x1024xbf16, #tpu.memory_space<vmem>>, vector<32x256xbf16>
    %cst = arith.constant dense<0.000000e+00> : vector<8x256xf32>
    %3 = tpu.matmul %1, %2, %cst {dimension_numbers = #tpu.dot_dimension_numbers<[1], [0], [0], [1], [0, 0, 1, 1], [], []>} : vector<8x32xbf16>, vector<32x256xbf16>, vector<8x256xf32> -> vector<8x256xf32>
    %cst_3 = arith.constant 0.00999999977 : f32
    %4 = vector.broadcast %cst_3 : f32 to vector<8x256xf32>
    %5 = arith.mulf %4, %3 : vector<8x256xf32>
    %6 = arith.maximumf %3, %5 : vector<8x256xf32>
    %7 = arith.truncf %6 : vector<8x256xf32> to vector<8x256xbf16>
    %c0_4 = arith.constant 0 : index
    %c0_5 = arith.constant 0 : index
    %8 = vector.load %arg3[%c0_4, %c0_5] : memref<1024x128xbf16, #tpu.memory_space<vmem>>, vector<256x128xbf16>
    %cst_6 = arith.constant dense<0.000000e+00> : vector<8x128xf32>
    %9 = tpu.matmul %7, %8, %cst_6 {dimension_numbers = #tpu.dot_dimension_numbers<[1], [0], [0], [1], [0, 0, 1, 1], [], []>} : vector<8x256xbf16>, vector<256x128xbf16>, vector<8x128xf32> -> vector<8x128xf32>
    %c0_7 = arith.constant 0 : index
    %c0_8 = arith.constant 0 : index
    %10 = vector.load %arg5[%c0_7, %c0_8] : memref<8x128xf32, #tpu.memory_space<vmem>>, vector<8x128xf32>
    tpu.vector_store %arg5[%c0_7, %c0_8], %9 {strides = array<i32>} : memref<8x128xf32, #tpu.memory_space<vmem>>, vector<8x128xf32>,
    %c0_9 = arith.constant 0 : index
    %c256 = arith.constant 256 : index
    %11 = vector.load %arg2[%c0_9, %c256] : memref<32x1024xbf16, #tpu.memory_space<vmem>>, vector<32x256xbf16>
    %cst_10 = arith.constant dense<0.000000e+00> : vector<8x256xf32>
    %12 = tpu.matmul %1, %11, %cst_10 {dimension_numbers = #tpu.dot_dimension_numbers<[1], [0], [0], [1], [0, 0, 1, 1], [], []>} : vector<8x32xbf16>, vector<32x256xbf16>, vector<8x256xf32> -> vector<8x256xf32>
    %cst_11 = arith.constant 0.00999999977 : f32
    %13 = vector.broadcast %cst_11 : f32 to vector<8x256xf32>
    %14 = arith.mulf %13, %12 : vector<8x256xf32>
    %15 = arith.maximumf %12, %14 : vector<8x256xf32>
    %16 = arith.truncf %15 : vector<8x256xf32> to vector<8x256xbf16>
    %c256_12 = arith.constant 256 : index
    %c0_13 = arith.constant 0 : index
    %17 = vector.load %arg3[%c256_12, %c0_13] : memref<1024x128xbf16, #tpu.memory_space<vmem>>, vector<256x128xbf16>
    %cst_14 = arith.constant dense<0.000000e+00> : vector<8x128xf32>
    %18 = tpu.matmul %16, %17, %cst_14 {dimension_numbers = #tpu.dot_dimension_numbers<[1], [0], [0], [1], [0, 0, 1, 1], [], []>} : vector<8x256xbf16>, vector<256x128xbf16>, vector<8x128xf32> -> vector<8x128xf32>
    %c0_15 = arith.constant 0 : index
    %c0_16 = arith.constant 0 : index
    %19 = vector.load %arg5[%c0_15, %c0_16] : memref<8x128xf32, #tpu.memory_space<vmem>>, vector<8x128xf32>
    %20 = arith.addf %19, %18 : vector<8x128xf32>
    %c0_17 = arith.constant 0 : index
    %c0_18 = arith.constant 0 : index
    %21 = vector.load %arg5[%c0_17, %c0_18] : memref<8x128xf32, #tpu.memory_space<vmem>>, vector<8x128xf32>
    tpu.vector_store %arg5[%c0_17, %c0_18], %20 {strides = array<i32>} : memref<8x128xf32, #tpu.memory_space<vmem>>, vector<8x128xf32>,
    %c0_19 = arith.constant 0 : index
    %c512 = arith.constant 512 : index
    %22 = vector.load %arg2[%c0_19, %c512] : memref<32x1024xbf16, #tpu.memory_space<vmem>>, vector<32x256xbf16>
    %cst_20 = arith.constant dense<0.000000e+00> : vector<8x256xf32>
    %23 = tpu.matmul %1, %22, %cst_20 {dimension_numbers = #tpu.dot_dimension_numbers<[1], [0], [0], [1], [0, 0, 1, 1], [], []>} : vector<8x32xbf16>, vector<32x256xbf16>, vector<8x256xf32> -> vector<8x256xf32>
    %cst_21 = arith.constant 0.00999999977 : f32
    %24 = vector.broadcast %cst_21 : f32 to vector<8x256xf32>
    %25 = arith.mulf %24, %23 : vector<8x256xf32>
    %26 = arith.maximumf %23, %25 : vector<8x256xf32>
    %27 = arith.truncf %26 : vector<8x256xf32> to vector<8x256xbf16>
    %c512_22 = arith.constant 512 : index
    %c0_23 = arith.constant 0 : index
    %28 = vector.load %arg3[%c512_22, %c0_23] : memref<1024x128xbf16, #tpu.memory_space<vmem>>, vector<256x128xbf16>
    %cst_24 = arith.constant dense<0.000000e+00> : vector<8x128xf32>
    %29 = tpu.matmul %27, %28, %cst_24 {dimension_numbers = #tpu.dot_dimension_numbers<[1], [0], [0], [1], [0, 0, 1, 1], [], []>} : vector<8x256xbf16>, vector<256x128xbf16>, vector<8x128xf32> -> vector<8x128xf32>
    %c0_25 = arith.constant 0 : index
    %c0_26 = arith.constant 0 : index
    %30 = vector.load %arg5[%c0_25, %c0_26] : memref<8x128xf32, #tpu.memory_space<vmem>>, vector<8x128xf32>
    %31 = arith.addf %30, %29 : vector<8x128xf32>
    %c0_27 = arith.constant 0 : index
    %c0_28 = arith.constant 0 : index
    %32 = vector.load %arg5[%c0_27, %c0_28] : memref<8x128xf32, #tpu.memory_space<vmem>>, vector<8x128xf32>
    tpu.vector_store %arg5[%c0_27, %c0_28], %31 {strides = array<i32>} : memref<8x128xf32, #tpu.memory_space<vmem>>, vector<8x128xf32>,
    %c0_29 = arith.constant 0 : index
    %c768 = arith.constant 768 : index
    %33 = vector.load %arg2[%c0_29, %c768] : memref<32x1024xbf16, #tpu.memory_space<vmem>>, vector<32x256xbf16>
    %cst_30 = arith.constant dense<0.000000e+00> : vector<8x256xf32>
    %34 = tpu.matmul %1, %33, %cst_30 {dimension_numbers = #tpu.dot_dimension_numbers<[1], [0], [0], [1], [0, 0, 1, 1], [], []>} : vector<8x32xbf16>, vector<32x256xbf16>, vector<8x256xf32> -> vector<8x256xf32>
    %cst_31 = arith.constant 0.00999999977 : f32
    %35 = vector.broadcast %cst_31 : f32 to vector<8x256xf32>
    %36 = arith.mulf %35, %34 : vector<8x256xf32>
    %37 = arith.maximumf %34, %36 : vector<8x256xf32>
    %38 = arith.truncf %37 : vector<8x256xf32> to vector<8x256xbf16>
    %c768_32 = arith.constant 768 : index
    %c0_33 = arith.constant 0 : index
    %39 = vector.load %arg3[%c768_32, %c0_33] : memref<1024x128xbf16, #tpu.memory_space<vmem>>, vector<256x128xbf16>
    %cst_34 = arith.constant dense<0.000000e+00> : vector<8x128xf32>
    %40 = tpu.matmul %38, %39, %cst_34 {dimension_numbers = #tpu.dot_dimension_numbers<[1], [0], [0], [1], [0, 0, 1, 1], [], []>} : vector<8x256xbf16>, vector<256x128xbf16>, vector<8x128xf32> -> vector<8x128xf32>
    %c0_35 = arith.constant 0 : index
    %c0_36 = arith.constant 0 : index
    %41 = vector.load %arg5[%c0_35, %c0_36] : memref<8x128xf32, #tpu.memory_space<vmem>>, vector<8x128xf32>
    %42 = arith.addf %41, %40 : vector<8x128xf32>
    %c0_37 = arith.constant 0 : index
    %c0_38 = arith.constant 0 : index
    %43 = vector.load %arg5[%c0_37, %c0_38] : memref<8x128xf32, #tpu.memory_space<vmem>>, vector<8x128xf32>
    tpu.vector_store %arg5[%c0_37, %c0_38], %42 {strides = array<i32>} : memref<8x128xf32, #tpu.memory_space<vmem>>, vector<8x128xf32>,
    %c0_39 = arith.constant 0 : index
    %c0_40 = arith.constant 0 : index
    %44 = vector.load %arg5[%c0_39, %c0_40] : memref<8x128xf32, #tpu.memory_space<vmem>>, vector<8x128xf32>
    %c0_41 = arith.constant 0 : index
    %c0_42 = arith.constant 0 : index
    %45 = vector.load %arg4[%c0_41, %c0_42] : memref<8x128xf32, #tpu.memory_space<vmem>>, vector<8x128xf32>
    tpu.vector_store %arg4[%c0_41, %c0_42], %44 {strides = array<i32>} : memref<8x128xf32, #tpu.memory_space<vmem>>, vector<8x128xf32>,
    return
  }
  func.func @transform_0(%arg0: i32) -> (i32, i32) {
    %c0_i32 = arith.constant 0 : i32
    %c0_i32_0 = arith.constant 0 : i32
    return %arg0, %c0_i32 : i32, i32
  }
  func.func @transform_1(%arg0: i32) -> (i32, i32) {
    %c0_i32 = arith.constant 0 : i32
    %c0_i32_0 = arith.constant 0 : i32
    %c0_i32_1 = arith.constant 0 : i32
    return %c0_i32, %c0_i32_0 : i32, i32
  }
  func.func @transform_2(%arg0: i32) -> (i32, i32) {
    %c0_i32 = arith.constant 0 : i32
    %c0_i32_0 = arith.constant 0 : i32
    %c0_i32_1 = arith.constant 0 : i32
    return %c0_i32, %c0_i32_0 : i32, i32
  }
  func.func @transform_3(%arg0: i32) -> (i32, i32) {
    %c0_i32 = arith.constant 0 : i32
    %c0_i32_0 = arith.constant 0 : i32
    return %arg0, %c0_i32 : i32, i32
  }
}

</mosaic_0001>

<llo_original>
// kernel: small_homo_classifier2_forward.1
$region0: #{small_homo_classifier2_forward.1}
  #allocation0 [shape = 'u32[]', space=smem, size = 0x4, offset = 0x4, fixed_abs, tag = 'smem constant byte address 0x4 - core index']
  #allocation1 [shape = 'u32[144,128]{1,0:T(1,128)}', space=vmem, size = 0x12000, scoped, tag = 'internal scratch']
  #allocation2 [shape = 'f32[8,128]{1,0:T(8,128)}', space=vmem, size = 0x1000, scoped, tag = 'scratch operand']
  %s0 = inlined_call_operand.hbm [shape: f32[8,32], index: 0, kind: input, shape index: {}]
  %s1 = inlined_call_operand.hbm [shape: bf16[32,1024], index: 1, kind: input, shape index: {}]
  %s2 = inlined_call_operand.hbm [shape: bf16[1024,128], index: 2, kind: input, shape index: {}]
  %s3 = inlined_call_operand.hbm [shape: f32[8,128], index: 3, kind: output, shape index: {}]
  %s4 = sld [smem:[#allocation0]]
  $region34: #{small_homo_classifier2_forward.1} parent=0
    _
  %s6 = ssub.s32 1, %s4
  %s7 = scalar_select 0, %s6, %s4
  $region1: #{small_homo_classifier2_forward.1} parent=0
    #allocation3 [shape = 'u8[4096]{0}', space=vmem, size = 0x1000, scoped, tag = 'input window, operand 0, single buffered']
    #allocation4 [shape = 's32[1]{0}', space=sflag, size = 0x4, scoped, tag = 'scoped memory for small_homo_classifier2_forward.1']
    #allocation5 [shape = 's32[1]{0}', space=sflag, size = 0x4, scoped, tag = 'scoped memory for small_homo_classifier2_forward.1']
    #allocation6 [shape = 'u8[65536]{0}', space=vmem, size = 0x10000, scoped, tag = 'input window, operand 1, single buffered']
    #allocation7 [shape = 's32[1]{0}', space=sflag, size = 0x4, scoped, tag = 'scoped memory for small_homo_classifier2_forward.1']
    #allocation8 [shape = 'u8[262144]{0}', space=vmem, size = 0x40000, scoped, tag = 'input window, operand 2, single buffered']
    #allocation9 [shape = 'u8[4096]{0}', space=vmem, size = 0x1000, scoped, tag = 'output window, operand 0, single buffered']
    %8 = vsyncpa [#allocation4], 0
    %9 = vsyncpa [#allocation7], 0
    %10 = vsyncpa [#allocation5], 0
    // Predicated region
    $region2: #{small_homo_classifier2_forward.1} parent=1 // pred_check
      _
    $region3: #{small_homo_classifier2_forward.1} parent=1 // pred_check_branch
      %12 = sbr.rel (0) target = $region5
    $region4: #{small_homo_classifier2_forward.1} parent=1 // pred_region
      %s14 = ssub.s32 128, 128
      %15 = vsyncadd [#allocation4], %s14
      %s17 = sshll.u32 [#allocation3], 4
      %s18 = int_to_ptr.vmem [resolvable:$true] %s17
      %20 = dma.hbm_to_vmem [thread:$0]  %s0, 128, %s18, [#allocation4]
    $region5: #{small_homo_classifier2_forward.1} parent=1 // pred_fallthru
      _
    // Predicated region
    $region6: #{small_homo_classifier2_forward.1} parent=1 // pred_check
      _
    $region7: #{small_homo_classifier2_forward.1} parent=1 // pred_check_branch
      %22 = sbr.rel (0) target = $region9
    $region8: #{small_homo_classifier2_forward.1} parent=1 // pred_region
      %s24 = ssub.s32 2048, 2048
      %25 = vsyncadd [#allocation7], %s24
      %s26 = sshll.u32 [#allocation6], 4
      %s27 = int_to_ptr.vmem [resolvable:$true] %s26
      %32 = dma.hbm_to_vmem [thread:$0]  %s1, 2048, %s27, [#allocation7], 512, 512, 32
    $region9: #{small_homo_classifier2_forward.1} parent=1 // pred_fallthru
      _
    // Predicated region
    $region10: #{small_homo_classifier2_forward.1} parent=1 // pred_check
      _
    $region11: #{small_homo_classifier2_forward.1} parent=1 // pred_check_branch
      %34 = sbr.rel (0) target = $region13
    $region12: #{small_homo_classifier2_forward.1} parent=1 // pred_region
      %s36 = ssub.s32 8192, 8192
      %37 = vsyncadd [#allocation7], %s36
      %s38 = sshll.u32 [#allocation8], 4
      %s39 = int_to_ptr.vmem [resolvable:$true] %s38
      %44 = dma.hbm_to_vmem [thread:$0]  %s2, 8192, %s39, [#allocation7], 64, 64, 4
    $region13: #{small_homo_classifier2_forward.1} parent=1 // pred_fallthru
      _
    // Predicated region
    $region14: #{small_homo_classifier2_forward.1} parent=1 // pred_check
      _
    $region15: #{small_homo_classifier2_forward.1} parent=1 // pred_check_branch
      %46 = sbr.rel (0) target = $region17
    $region16: #{small_homo_classifier2_forward.1} parent=1 // pred_region
      %47 = dma.done [#allocation4], 128
    $region17: #{small_homo_classifier2_forward.1} parent=1 // pred_fallthru
      _
    // Predicated region
    $region18: #{small_homo_classifier2_forward.1} parent=1 // pred_check
      _
    $region19: #{small_homo_classifier2_forward.1} parent=1 // pred_check_branch
      %49 = sbr.rel (0) target = $region21
    $region20: #{small_homo_classifier2_forward.1} parent=1 // pred_region
      %50 = dma.done [#allocation7], 2048
    $region21: #{small_homo_classifier2_forward.1} parent=1 // pred_fallthru
      _
    // Predicated region
    $region22: #{small_homo_classifier2_forward.1} parent=1 // pred_check
      _
    $region23: #{small_homo_classifier2_forward.1} parent=1 // pred_check_branch
      %52 = sbr.rel (0) target = $region25
    $region24: #{small_homo_classifier2_forward.1} parent=1 // pred_region
      %53 = dma.done [#allocation7], 8192
    $region25: #{small_homo_classifier2_forward.1} parent=1 // pred_fallthru
      _
    %v55 = vld [vmem:[#allocation3] sm:$0xff]
    %v56 = vpack.c.bf16 %v55, %v55
    %v57 = vld [vmem:[#allocation6] sm:$0xff]
    %v58 = vld [vmem:[#allocation6 + $0x20] sm:$0xff]
    %v59 = vld [vmem:[#allocation6 + $0x40] sm:$0xff]
    %v60 = vld [vmem:[#allocation6 + $0x60] sm:$0xff]
    %v65 = vunpack.c.l.b16 %v57
    %v66 = vunpack.c.h.b16 %v57
    %v67 = vunpack.c.l.b16 %v58
    %v68 = vunpack.c.h.b16 %v58
    %v69 = vunpack.c.l.b16 %v59
    %v70 = vunpack.c.h.b16 %v59
    %v71 = vunpack.c.l.b16 %v60
    %v72 = vunpack.c.h.b16 %v60
    %v73 = vpack.c.b16 %v67, %v65
    %v74 = vpack.c.b16 %v68, %v66
    %v75 = vpack.c.b16 %v71, %v69
    %v76 = vpack.c.b16 %v72, %v70
    %vm81 = vcmask 261120
    %v83 = vsel %vm81, %v56, 0
    %85 = vmatprep.subr.bf16.mxu0 %v74
    %86 = vmatpush1.bf16.msra.mxu0 %v73
    %87 = vmatprep.subr.bf16.mxu0 %v76
    %88 = vmatpush1.bf16.msra.mxu0 %v75
    %89 = vmatprep.subr.bf16.mxu0 0
    %90 = vmatpush1.bf16.msra.mxu0 0
    %91 = vmatprep.subr.bf16.mxu0 0
    %92 = vmatpush1.bf16.msra.mxu0 0
    %93 = vmatprep.subr.bf16.mxu0 0
    %94 = vmatpush1.bf16.msra.mxu0 0
    %95 = vmatprep.subr.bf16.mxu0 0
    %96 = vmatpush1.bf16.msra.mxu0 0
    %97 = vmatprep.subr.bf16.mxu0 0
    %98 = vmatpush1.bf16.msra.mxu0 0
    %99 = vmatprep.subr.bf16.mxu0 0
    %100 = vmatpush1.bf16.msra.mxu0 0
    %101 = vmatprep.subr.bf16.mxu0 0
    %102 = vmatpush1.bf16.msra.mxu0 0
    %103 = vmatprep.subr.bf16.mxu0 0
    %104 = vmatpush1.bf16.msra.mxu0 0
    %105 = vmatprep.subr.bf16.mxu0 0
    %106 = vmatpush1.bf16.msra.mxu0 0
    %107 = vmatprep.subr.bf16.mxu0 0
    %108 = vmatpush1.bf16.msra.mxu0 0
    %109 = vmatprep.subr.bf16.mxu0 0
    %110 = vmatpush1.bf16.msra.mxu0 0
    %111 = vmatprep.subr.bf16.mxu0 0
    %112 = vmatpush1.bf16.msra.mxu0 0
    %113 = vmatprep.subr.bf16.mxu0 0
    %114 = vmatpush1.bf16.msra.mxu0 0
    %115 = vmatprep.subr.bf16.mxu0 0
    %116 = vmatpush1.bf16.msra.mxu0 0
    %117 = vmatprep.mubr.bf16.mxu0 0
    %118 = vmatmul.mubr.bf16.gmra.mrb[0].mxu0 %v83
    %v119 = vpop.f32.mrb[0].mxu0
    %v120 = vadd.f32 0.0, %v119
    %v121 = vpop.f32.mrb[0].mxu0
    %v122 = vadd.f32 0.0, %v121
    %v123 = vpop.f32.mrb[0].mxu0
    %v124 = vpop.f32.mrb[0].mxu0
    %125 = vdwg.mxu0
    %v126 = vmul.f32 %v120, 0.01
    %v127 = vmul.f32 %v122, 0.01
    %v128 = vmax.f32 %v120, %v126
    %v129 = vmax.f32 %v122, %v127
    %v130 = vpack.c.bf16 %v128, %v128
    %v131 = vpack.c.bf16 %v129, %v129
    %v132 = vld [vmem:[#allocation8] sm:$0xf]
    %v133 = vld [vmem:[#allocation8 + $0x4] sm:$0xf]
    %v134 = vld [vmem:[#allocation8 + $0x8] sm:$0xf]
    %v135 = vld [vmem:[#allocation8 + $0xc] sm:$0xf]
    %v136 = vld [vmem:[#allocation8 + $0x10] sm:$0xf]
    %v137 = vld [vmem:[#allocation8 + $0x14] sm:$0xf]
    %v138 = vld [vmem:[#allocation8 + $0x18] sm:$0xf]
    %v139 = vld [vmem:[#allocation8 + $0x1c] sm:$0xf]
    %v140 = vld [vmem:[#allocation8 + $0x20] sm:$0xf]
    %v141 = vld [vmem:[#allocation8 + $0x24] sm:$0xf]
    %v142 = vld [vmem:[#allocation8 + $0x28] sm:$0xf]
    %v143 = vld [vmem:[#allocation8 + $0x2c] sm:$0xf]
    %v144 = vld [vmem:[#allocation8 + $0x30] sm:$0xf]
    %v145 = vld [vmem:[#allocation8 + $0x34] sm:$0xf]
    %v146 = vld [vmem:[#allocation8 + $0x38] sm:$0xf]
    %v147 = vld [vmem:[#allocation8 + $0x3c] sm:$0xf]
    %v148 = vld [vmem:[#allocation8 + $0x40] sm:$0xf]
    %v149 = vld [vmem:[#allocation8 + $0x44] sm:$0xf]
    %v150 = vld [vmem:[#allocation8 + $0x48] sm:$0xf]
    %v151 = vld [vmem:[#allocation8 + $0x4c] sm:$0xf]
    %v152 = vld [vmem:[#allocation8 + $0x50] sm:$0xf]
    %v153 = vld [vmem:[#allocation8 + $0x54] sm:$0xf]
    %v154 = vld [vmem:[#allocation8 + $0x58] sm:$0xf]
    %v155 = vld [vmem:[#allocation8 + $0x5c] sm:$0xf]
    %v156 = vld [vmem:[#allocation8 + $0x60] sm:$0xf]
    %v157 = vld [vmem:[#allocation8 + $0x64] sm:$0xf]
    %v158 = vld [vmem:[#allocation8 + $0x68] sm:$0xf]
    %v159 = vld [vmem:[#allocation8 + $0x6c] sm:$0xf]
    %v160 = vld [vmem:[#allocation8 + $0x70] sm:$0xf]
    %v161 = vld [vmem:[#allocation8 + $0x74] sm:$0xf]
    %v162 = vld [vmem:[#allocation8 + $0x78] sm:$0xf]
    %v163 = vld [vmem:[#allocation8 + $0x7c] sm:$0xf]
    %v196 = vunpack.c.l.b16 %v132
    %v197 = vunpack.c.l.b16 %v133
    %v198 = vunpack.c.l.b16 %v134
    %v199 = vunpack.c.l.b16 %v135
    %v200 = vunpack.c.l.b16 %v136
    %v201 = vunpack.c.l.b16 %v137
    %v202 = vunpack.c.l.b16 %v138
    %v203 = vunpack.c.l.b16 %v139
    %v204 = vunpack.c.l.b16 %v140
    %v205 = vunpack.c.l.b16 %v141
    %v206 = vunpack.c.l.b16 %v142
    %v207 = vunpack.c.l.b16 %v143
    %v208 = vunpack.c.l.b16 %v144
    %v209 = vunpack.c.l.b16 %v145
    %v210 = vunpack.c.l.b16 %v146
    %v211 = vunpack.c.l.b16 %v147
    %v212 = vunpack.c.l.b16 %v148
    %v213 = vunpack.c.l.b16 %v149
    %v214 = vunpack.c.l.b16 %v150
    %v215 = vunpack.c.l.b16 %v151
    %v216 = vunpack.c.l.b16 %v152
    %v217 = vunpack.c.l.b16 %v153
    %v218 = vunpack.c.l.b16 %v154
    %v219 = vunpack.c.l.b16 %v155
    %v220 = vunpack.c.l.b16 %v156
    %v221 = vunpack.c.l.b16 %v157
    %v222 = vunpack.c.l.b16 %v158
    %v223 = vunpack.c.l.b16 %v159
    %v224 = vunpack.c.l.b16 %v160
    %v225 = vunpack.c.l.b16 %v161
    %v226 = vunpack.c.l.b16 %v162
    %v227 = vunpack.c.l.b16 %v163
    %v228 = vpack.c.b16 %v197, %v196
    %v229 = vpack.c.b16 %v199, %v198
    %v230 = vpack.c.b16 %v201, %v200
    %v231 = vpack.c.b16 %v203, %v202
    %v232 = vpack.c.b16 %v205, %v204
    %v233 = vpack.c.b16 %v207, %v206
    %v234 = vpack.c.b16 %v209, %v208
    %v235 = vpack.c.b16 %v211, %v210
    %v236 = vpack.c.b16 %v213, %v212
    %v237 = vpack.c.b16 %v215, %v214
    %v238 = vpack.c.b16 %v217, %v216
    %v239 = vpack.c.b16 %v219, %v218
    %v240 = vpack.c.b16 %v221, %v220
    %v241 = vpack.c.b16 %v223, %v222
    %v242 = vpack.c.b16 %v225, %v224
    %v243 = vpack.c.b16 %v227, %v226
    %260 = vmatprep.subr.bf16.mxu0 0
    %261 = vmatpush1.bf16.msra.mxu0 %v228
    %262 = vmatprep.subr.bf16.mxu0 0
    %263 = vmatpush1.bf16.msra.mxu0 %v229
    %264 = vmatprep.subr.bf16.mxu0 0
    %265 = vmatpush1.bf16.msra.mxu0 %v230
    %266 = vmatprep.subr.bf16.mxu0 0
    %267 = vmatpush1.bf16.msra.mxu0 %v231
    %268 = vmatprep.subr.bf16.mxu0 0
    %269 = vmatpush1.bf16.msra.mxu0 %v232
    %270 = vmatprep.subr.bf16.mxu0 0
    %271 = vmatpush1.bf16.msra.mxu0 %v233
    %272 = vmatprep.subr.bf16.mxu0 0
    %273 = vmatpush1.bf16.msra.mxu0 %v234
    %274 = vmatprep.subr.bf16.mxu0 0
    %275 = vmatpush1.bf16.msra.mxu0 %v235
    %276 = vmatprep.subr.bf16.mxu0 0
    %277 = vmatpush1.bf16.msra.mxu0 %v236
    %278 = vmatprep.subr.bf16.mxu0 0
    %279 = vmatpush1.bf16.msra.mxu0 %v237
    %280 = vmatprep.subr.bf16.mxu0 0
    %281 = vmatpush1.bf16.msra.mxu0 %v238
    %282 = vmatprep.subr.bf16.mxu0 0
    %283 = vmatpush1.bf16.msra.mxu0 %v239
    %284 = vmatprep.subr.bf16.mxu0 0
    %285 = vmatpush1.bf16.msra.mxu0 %v240
    %286 = vmatprep.subr.bf16.mxu0 0
    %287 = vmatpush1.bf16.msra.mxu0 %v241
    %288 = vmatprep.subr.bf16.mxu0 0
    %289 = vmatpush1.bf16.msra.mxu0 %v242
    %290 = vmatprep.subr.bf16.mxu0 0
    %291 = vmatpush1.bf16.msra.mxu0 %v243
    %292 = vmatprep.mubr.bf16.mxu0 %v131
    %293 = vmatmul.mubr.bf16.gmra.mrb[0].mxu0 %v130
    %v294 = vpop.f32.mrb[0].mxu0
    %v295 = vadd.f32 0.0, %v294
    %v296 = vpop.f32.mrb[0].mxu0
    %v297 = vpop.f32.mrb[0].mxu0
    %v298 = vpop.f32.mrb[0].mxu0
    %299 = vdwg.mxu0
    %300 = vst [vmem:[#allocation2] sm:$0xff] %v295
    %v301 = vld [vmem:[#allocation6 + $0x8] sm:$0xff]
    %v302 = vld [vmem:[#allocation6 + $0x28] sm:$0xff]
    %v303 = vld [vmem:[#allocation6 + $0x48] sm:$0xff]
    %v304 = vld [vmem:[#allocation6 + $0x68] sm:$0xff]
    %v309 = vunpack.c.l.b16 %v301
    %v310 = vunpack.c.h.b16 %v301
    %v311 = vunpack.c.l.b16 %v302
    %v312 = vunpack.c.h.b16 %v302
    %v313 = vunpack.c.l.b16 %v303
    %v314 = vunpack.c.h.b16 %v303
    %v315 = vunpack.c.l.b16 %v304
    %v316 = vunpack.c.h.b16 %v304
    %v317 = vpack.c.b16 %v311, %v309
    %v318 = vpack.c.b16 %v312, %v310
    %v319 = vpack.c.b16 %v315, %v313
    %v320 = vpack.c.b16 %v316, %v314
    %325 = vmatprep.subr.bf16.mxu0 %v318
    %326 = vmatpush1.bf16.msra.mxu0 %v317
    %327 = vmatprep.subr.bf16.mxu0 %v320
    %328 = vmatpush1.bf16.msra.mxu0 %v319
    %329 = vmatprep.subr.bf16.mxu0 0
    %330 = vmatpush1.bf16.msra.mxu0 0
    %331 = vmatprep.subr.bf16.mxu0 0
    %332 = vmatpush1.bf16.msra.mxu0 0
    %333 = vmatprep.subr.bf16.mxu0 0
    %334 = vmatpush1.bf16.msra.mxu0 0
    %335 = vmatprep.subr.bf16.mxu0 0
    %336 = vmatpush1.bf16.msra.mxu0 0
    %337 = vmatprep.subr.bf16.mxu0 0
    %338 = vmatpush1.bf16.msra.mxu0 0
    %339 = vmatprep.subr.bf16.mxu0 0
    %340 = vmatpush1.bf16.msra.mxu0 0
    %341 = vmatprep.subr.bf16.mxu0 0
    %342 = vmatpush1.bf16.msra.mxu0 0
    %343 = vmatprep.subr.bf16.mxu0 0
    %344 = vmatpush1.bf16.msra.mxu0 0
    %345 = vmatprep.subr.bf16.mxu0 0
    %346 = vmatpush1.bf16.msra.mxu0 0
    %347 = vmatprep.subr.bf16.mxu0 0
    %348 = vmatpush1.bf16.msra.mxu0 0
    %349 = vmatprep.subr.bf16.mxu0 0
    %350 = vmatpush1.bf16.msra.mxu0 0
    %351 = vmatprep.subr.bf16.mxu0 0
    %352 = vmatpush1.bf16.msra.mxu0 0
    %353 = vmatprep.subr.bf16.mxu0 0
    %354 = vmatpush1.bf16.msra.mxu0 0
    %355 = vmatprep.subr.bf16.mxu0 0
    %356 = vmatpush1.bf16.msra.mxu0 0
    %357 = vmatprep.mubr.bf16.mxu0 0
    %358 = vmatmul.mubr.bf16.gmra.mrb[0].mxu0 %v83
    %v359 = vpop.f32.mrb[0].mxu0
    %v360 = vadd.f32 0.0, %v359
    %v361 = vpop.f32.mrb[0].mxu0
    %v362 = vadd.f32 0.0, %v361
    %v363 = vpop.f32.mrb[0].mxu0
    %v364 = vpop.f32.mrb[0].mxu0
    %365 = vdwg.mxu0
    %v366 = vmul.f32 %v360, 0.01
    %v367 = vmul.f32 %v362, 0.01
    %v368 = vmax.f32 %v360, %v366
    %v369 = vmax.f32 %v362, %v367
    %v370 = vpack.c.bf16 %v368, %v368
    %v371 = vpack.c.bf16 %v369, %v369
    %v372 = vld [vmem:[#allocation8 + $0x80] sm:$0xf]
    %v373 = vld [vmem:[#allocation8 + $0x84] sm:$0xf]
    %v374 = vld [vmem:[#allocation8 + $0x88] sm:$0xf]
    %v375 = vld [vmem:[#allocation8 + $0x8c] sm:$0xf]
    %v376 = vld [vmem:[#allocation8 + $0x90] sm:$0xf]
    %v377 = vld [vmem:[#allocation8 + $0x94] sm:$0xf]
    %v378 = vld [vmem:[#allocation8 + $0x98] sm:$0xf]
    %v379 = vld [vmem:[#allocation8 + $0x9c] sm:$0xf]
    %v380 = vld [vmem:[#allocation8 + $0xa0] sm:$0xf]
    %v381 = vld [vmem:[#allocation8 + $0xa4] sm:$0xf]
    %v382 = vld [vmem:[#allocation8 + $0xa8] sm:$0xf]
    %v383 = vld [vmem:[#allocation8 + $0xac] sm:$0xf]
    %v384 = vld [vmem:[#allocation8 + $0xb0] sm:$0xf]
    %v385 = vld [vmem:[#allocation8 + $0xb4] sm:$0xf]
    %v386 = vld [vmem:[#allocation8 + $0xb8] sm:$0xf]
    %v387 = vld [vmem:[#allocation8 + $0xbc] sm:$0xf]
    %v388 = vld [vmem:[#allocation8 + $0xc0] sm:$0xf]
    %v389 = vld [vmem:[#allocation8 + $0xc4] sm:$0xf]
    %v390 = vld [vmem:[#allocation8 + $0xc8] sm:$0xf]
    %v391 = vld [vmem:[#allocation8 + $0xcc] sm:$0xf]
    %v392 = vld [vmem:[#allocation8 + $0xd0] sm:$0xf]
    %v393 = vld [vmem:[#allocation8 + $0xd4] sm:$0xf]
    %v394 = vld [vmem:[#allocation8 + $0xd8] sm:$0xf]
    %v395 = vld [vmem:[#allocation8 + $0xdc] sm:$0xf]
    %v396 = vld [vmem:[#allocation8 + $0xe0] sm:$0xf]
    %v397 = vld [vmem:[#allocation8 + $0xe4] sm:$0xf]
    %v398 = vld [vmem:[#allocation8 + $0xe8] sm:$0xf]
    %v399 = vld [vmem:[#allocation8 + $0xec] sm:$0xf]
    %v400 = vld [vmem:[#allocation8 + $0xf0] sm:$0xf]
    %v401 = vld [vmem:[#allocation8 + $0xf4] sm:$0xf]
    %v402 = vld [vmem:[#allocation8 + $0xf8] sm:$0xf]
    %v403 = vld [vmem:[#allocation8 + $0xfc] sm:$0xf]
    %v436 = vunpack.c.l.b16 %v372
    %v437 = vunpack.c.l.b16 %v373
    %v438 = vunpack.c.l.b16 %v374
    %v439 = vunpack.c.l.b16 %v375
    %v440 = vunpack.c.l.b16 %v376
    %v441 = vunpack.c.l.b16 %v377
    %v442 = vunpack.c.l.b16 %v378
    %v443 = vunpack.c.l.b16 %v379
    %v444 = vunpack.c.l.b16 %v380
    %v445 = vunpack.c.l.b16 %v381
    %v446 = vunpack.c.l.b16 %v382
    %v447 = vunpack.c.l.b16 %v383
    %v448 = vunpack.c.l.b16 %v384
    %v449 = vunpack.c.l.b16 %v385
    %v450 = vunpack.c.l.b16 %v386
    %v451 = vunpack.c.l.b16 %v387
    %v452 = vunpack.c.l.b16 %v388
    %v453 = vunpack.c.l.b16 %v389
    %v454 = vunpack.c.l.b16 %v390
    %v455 = vunpack.c.l.b16 %v391
    %v456 = vunpack.c.l.b16 %v392
    %v457 = vunpack.c.l.b16 %v393
    %v458 = vunpack.c.l.b16 %v394
    %v459 = vunpack.c.l.b16 %v395
    %v460 = vunpack.c.l.b16 %v396
    %v461 = vunpack.c.l.b16 %v397
    %v462 = vunpack.c.l.b16 %v398
    %v463 = vunpack.c.l.b16 %v399
    %v464 = vunpack.c.l.b16 %v400
    %v465 = vunpack.c.l.b16 %v401
    %v466 = vunpack.c.l.b16 %v402
    %v467 = vunpack.c.l.b16 %v403
    %v468 = vpack.c.b16 %v437, %v436
    %v469 = vpack.c.b16 %v439, %v438
    %v470 = vpack.c.b16 %v441, %v440
    %v471 = vpack.c.b16 %v443, %v442
    %v472 = vpack.c.b16 %v445, %v444
    %v473 = vpack.c.b16 %v447, %v446
    %v474 = vpack.c.b16 %v449, %v448
    %v475 = vpack.c.b16 %v451, %v450
    %v476 = vpack.c.b16 %v453, %v452
    %v477 = vpack.c.b16 %v455, %v454
    %v478 = vpack.c.b16 %v457, %v456
    %v479 = vpack.c.b16 %v459, %v458
    %v480 = vpack.c.b16 %v461, %v460
    %v481 = vpack.c.b16 %v463, %v462
    %v482 = vpack.c.b16 %v465, %v464
    %v483 = vpack.c.b16 %v467, %v466
    %500 = vmatprep.subr.bf16.mxu0 0
    %501 = vmatpush1.bf16.msra.mxu0 %v468
    %502 = vmatprep.subr.bf16.mxu0 0
    %503 = vmatpush1.bf16.msra.mxu0 %v469
    %504 = vmatprep.subr.bf16.mxu0 0
    %505 = vmatpush1.bf16.msra.mxu0 %v470
    %506 = vmatprep.subr.bf16.mxu0 0
    %507 = vmatpush1.bf16.msra.mxu0 %v471
    %508 = vmatprep.subr.bf16.mxu0 0
    %509 = vmatpush1.bf16.msra.mxu0 %v472
    %510 = vmatprep.subr.bf16.mxu0 0
    %511 = vmatpush1.bf16.msra.mxu0 %v473
    %512 = vmatprep.subr.bf16.mxu0 0
    %513 = vmatpush1.bf16.msra.mxu0 %v474
    %514 = vmatprep.subr.bf16.mxu0 0
    %515 = vmatpush1.bf16.msra.mxu0 %v475
    %516 = vmatprep.subr.bf16.mxu0 0
    %517 = vmatpush1.bf16.msra.mxu0 %v476
    %518 = vmatprep.subr.bf16.mxu0 0
    %519 = vmatpush1.bf16.msra.mxu0 %v477
    %520 = vmatprep.subr.bf16.mxu0 0
    %521 = vmatpush1.bf16.msra.mxu0 %v478
    %522 = vmatprep.subr.bf16.mxu0 0
    %523 = vmatpush1.bf16.msra.mxu0 %v479
    %524 = vmatprep.subr.bf16.mxu0 0
    %525 = vmatpush1.bf16.msra.mxu0 %v480
    %526 = vmatprep.subr.bf16.mxu0 0
    %527 = vmatpush1.bf16.msra.mxu0 %v481
    %528 = vmatprep.subr.bf16.mxu0 0
    %529 = vmatpush1.bf16.msra.mxu0 %v482
    %530 = vmatprep.subr.bf16.mxu0 0
    %531 = vmatpush1.bf16.msra.mxu0 %v483
    %532 = vmatprep.mubr.bf16.mxu0 %v371
    %533 = vmatmul.mubr.bf16.gmra.mrb[0].mxu0 %v370
    %v534 = vpop.f32.mrb[0].mxu0
    %v535 = vadd.f32 0.0, %v534
    %v536 = vpop.f32.mrb[0].mxu0
    %v537 = vpop.f32.mrb[0].mxu0
    %v538 = vpop.f32.mrb[0].mxu0
    %539 = vdwg.mxu0
    %v540 = vld [vmem:[#allocation2] sm:$0xff]
    %v541 = vadd.f32 %v540, %v535
    %542 = vst [vmem:[#allocation2] sm:$0xff] %v541
    %v543 = vld [vmem:[#allocation6 + $0x10] sm:$0xff]
    %v544 = vld [vmem:[#allocation6 + $0x30] sm:$0xff]
    %v545 = vld [vmem:[#allocation6 + $0x50] sm:$0xff]
    %v546 = vld [vmem:[#allocation6 + $0x70] sm:$0xff]
    %v551 = vunpack.c.l.b16 %v543
    %v552 = vunpack.c.h.b16 %v543
    %v553 = vunpack.c.l.b16 %v544
    %v554 = vunpack.c.h.b16 %v544
    %v555 = vunpack.c.l.b16 %v545
    %v556 = vunpack.c.h.b16 %v545
    %v557 = vunpack.c.l.b16 %v546
    %v558 = vunpack.c.h.b16 %v546
    %v559 = vpack.c.b16 %v553, %v551
    %v560 = vpack.c.b16 %v554, %v552
    %v561 = vpack.c.b16 %v557, %v555
    %v562 = vpack.c.b16 %v558, %v556
    %567 = vmatprep.subr.bf16.mxu0 %v560
    %568 = vmatpush1.bf16.msra.mxu0 %v559
    %569 = vmatprep.subr.bf16.mxu0 %v562
    %570 = vmatpush1.bf16.msra.mxu0 %v561
    %571 = vmatprep.subr.bf16.mxu0 0
    %572 = vmatpush1.bf16.msra.mxu0 0
    %573 = vmatprep.subr.bf16.mxu0 0
    %574 = vmatpush1.bf16.msra.mxu0 0
    %575 = vmatprep.subr.bf16.mxu0 0
    %576 = vmatpush1.bf16.msra.mxu0 0
    %577 = vmatprep.subr.bf16.mxu0 0
    %578 = vmatpush1.bf16.msra.mxu0 0
    %579 = vmatprep.subr.bf16.mxu0 0
    %580 = vmatpush1.bf16.msra.mxu0 0
    %581 = vmatprep.subr.bf16.mxu0 0
    %582 = vmatpush1.bf16.msra.mxu0 0
    %583 = vmatprep.subr.bf16.mxu0 0
    %584 = vmatpush1.bf16.msra.mxu0 0
    %585 = vmatprep.subr.bf16.mxu0 0
    %586 = vmatpush1.bf16.msra.mxu0 0
    %587 = vmatprep.subr.bf16.mxu0 0
    %588 = vmatpush1.bf16.msra.mxu0 0
    %589 = vmatprep.subr.bf16.mxu0 0
    %590 = vmatpush1.bf16.msra.mxu0 0
    %591 = vmatprep.subr.bf16.mxu0 0
    %592 = vmatpush1.bf16.msra.mxu0 0
    %593 = vmatprep.subr.bf16.mxu0 0
    %594 = vmatpush1.bf16.msra.mxu0 0
    %595 = vmatprep.subr.bf16.mxu0 0
    %596 = vmatpush1.bf16.msra.mxu0 0
    %597 = vmatprep.subr.bf16.mxu0 0
    %598 = vmatpush1.bf16.msra.mxu0 0
    %599 = vmatprep.mubr.bf16.mxu0 0
    %600 = vmatmul.mubr.bf16.gmra.mrb[0].mxu0 %v83
    %v601 = vpop.f32.mrb[0].mxu0
    %v602 = vadd.f32 0.0, %v601
    %v603 = vpop.f32.mrb[0].mxu0
    %v604 = vadd.f32 0.0, %v603
    %v605 = vpop.f32.mrb[0].mxu0
    %v606 = vpop.f32.mrb[0].mxu0
    %607 = vdwg.mxu0
    %v608 = vmul.f32 %v602, 0.01
    %v609 = vmul.f32 %v604, 0.01
    %v610 = vmax.f32 %v602, %v608
    %v611 = vmax.f32 %v604, %v609
    %v612 = vpack.c.bf16 %v610, %v610
    %v613 = vpack.c.bf16 %v611, %v611
    %v614 = vld [vmem:[#allocation8 + $0x100] sm:$0xf]
    %v615 = vld [vmem:[#allocation8 + $0x104] sm:$0xf]
    %v616 = vld [vmem:[#allocation8 + $0x108] sm:$0xf]
    %v617 = vld [vmem:[#allocation8 + $0x10c] sm:$0xf]
    %v618 = vld [vmem:[#allocation8 + $0x110] sm:$0xf]
    %v619 = vld [vmem:[#allocation8 + $0x114] sm:$0xf]
    %v620 = vld [vmem:[#allocation8 + $0x118] sm:$0xf]
    %v621 = vld [vmem:[#allocation8 + $0x11c] sm:$0xf]
    %v622 = vld [vmem:[#allocation8 + $0x120] sm:$0xf]
    %v623 = vld [vmem:[#allocation8 + $0x124] sm:$0xf]
    %v624 = vld [vmem:[#allocation8 + $0x128] sm:$0xf]
    %v625 = vld [vmem:[#allocation8 + $0x12c] sm:$0xf]
    %v626 = vld [vmem:[#allocation8 + $0x130] sm:$0xf]
    %v627 = vld [vmem:[#allocation8 + $0x134] sm:$0xf]
    %v628 = vld [vmem:[#allocation8 + $0x138] sm:$0xf]
    %v629 = vld [vmem:[#allocation8 + $0x13c] sm:$0xf]
    %v630 = vld [vmem:[#allocation8 + $0x140] sm:$0xf]
    %v631 = vld [vmem:[#allocation8 + $0x144] sm:$0xf]
    %v632 = vld [vmem:[#allocation8 + $0x148] sm:$0xf]
    %v633 = vld [vmem:[#allocation8 + $0x14c] sm:$0xf]
    %v634 = vld [vmem:[#allocation8 + $0x150] sm:$0xf]
    %v635 = vld [vmem:[#allocation8 + $0x154] sm:$0xf]
    %v636 = vld [vmem:[#allocation8 + $0x158] sm:$0xf]
    %v637 = vld [vmem:[#allocation8 + $0x15c] sm:$0xf]
    %v638 = vld [vmem:[#allocation8 + $0x160] sm:$0xf]
    %v639 = vld [vmem:[#allocation8 + $0x164] sm:$0xf]
    %v640 = vld [vmem:[#allocation8 + $0x168] sm:$0xf]
    %v641 = vld [vmem:[#allocation8 + $0x16c] sm:$0xf]
    %v642 = vld [vmem:[#allocation8 + $0x170] sm:$0xf]
    %v643 = vld [vmem:[#allocation8 + $0x174] sm:$0xf]
    %v644 = vld [vmem:[#allocation8 + $0x178] sm:$0xf]
    %v645 = vld [vmem:[#allocation8 + $0x17c] sm:$0xf]
    %v678 = vunpack.c.l.b16 %v614
    %v679 = vunpack.c.l.b16 %v615
    %v680 = vunpack.c.l.b16 %v616
    %v681 = vunpack.c.l.b16 %v617
    %v682 = vunpack.c.l.b16 %v618
    %v683 = vunpack.c.l.b16 %v619
    %v684 = vunpack.c.l.b16 %v620
    %v685 = vunpack.c.l.b16 %v621
    %v686 = vunpack.c.l.b16 %v622
    %v687 = vunpack.c.l.b16 %v623
    %v688 = vunpack.c.l.b16 %v624
    %v689 = vunpack.c.l.b16 %v625
    %v690 = vunpack.c.l.b16 %v626
    %v691 = vunpack.c.l.b16 %v627
    %v692 = vunpack.c.l.b16 %v628
    %v693 = vunpack.c.l.b16 %v629
    %v694 = vunpack.c.l.b16 %v630
    %v695 = vunpack.c.l.b16 %v631
    %v696 = vunpack.c.l.b16 %v632
    %v697 = vunpack.c.l.b16 %v633
    %v698 = vunpack.c.l.b16 %v634
    %v699 = vunpack.c.l.b16 %v635
    %v700 = vunpack.c.l.b16 %v636
    %v701 = vunpack.c.l.b16 %v637
    %v702 = vunpack.c.l.b16 %v638
    %v703 = vunpack.c.l.b16 %v639
    %v704 = vunpack.c.l.b16 %v640
    %v705 = vunpack.c.l.b16 %v641
    %v706 = vunpack.c.l.b16 %v642
    %v707 = vunpack.c.l.b16 %v643
    %v708 = vunpack.c.l.b16 %v644
    %v709 = vunpack.c.l.b16 %v645
    %v710 = vpack.c.b16 %v679, %v678
    %v711 = vpack.c.b16 %v681, %v680
    %v712 = vpack.c.b16 %v683, %v682
    %v713 = vpack.c.b16 %v685, %v684
    %v714 = vpack.c.b16 %v687, %v686
    %v715 = vpack.c.b16 %v689, %v688
    %v716 = vpack.c.b16 %v691, %v690
    %v717 = vpack.c.b16 %v693, %v692
    %v718 = vpack.c.b16 %v695, %v694
    %v719 = vpack.c.b16 %v697, %v696
    %v720 = vpack.c.b16 %v699, %v698
    %v721 = vpack.c.b16 %v701, %v700
    %v722 = vpack.c.b16 %v703, %v702
    %v723 = vpack.c.b16 %v705, %v704
    %v724 = vpack.c.b16 %v707, %v706
    %v725 = vpack.c.b16 %v709, %v708
    %742 = vmatprep.subr.bf16.mxu0 0
    %743 = vmatpush1.bf16.msra.mxu0 %v710
    %744 = vmatprep.subr.bf16.mxu0 0
    %745 = vmatpush1.bf16.msra.mxu0 %v711
    %746 = vmatprep.subr.bf16.mxu0 0
    %747 = vmatpush1.bf16.msra.mxu0 %v712
    %748 = vmatprep.subr.bf16.mxu0 0
    %749 = vmatpush1.bf16.msra.mxu0 %v713
    %750 = vmatprep.subr.bf16.mxu0 0
    %751 = vmatpush1.bf16.msra.mxu0 %v714
    %752 = vmatprep.subr.bf16.mxu0 0
    %753 = vmatpush1.bf16.msra.mxu0 %v715
    %754 = vmatprep.subr.bf16.mxu0 0
    %755 = vmatpush1.bf16.msra.mxu0 %v716
    %756 = vmatprep.subr.bf16.mxu0 0
    %757 = vmatpush1.bf16.msra.mxu0 %v717
    %758 = vmatprep.subr.bf16.mxu0 0
    %759 = vmatpush1.bf16.msra.mxu0 %v718
    %760 = vmatprep.subr.bf16.mxu0 0
    %761 = vmatpush1.bf16.msra.mxu0 %v719
    %762 = vmatprep.subr.bf16.mxu0 0
    %763 = vmatpush1.bf16.msra.mxu0 %v720
    %764 = vmatprep.subr.bf16.mxu0 0
    %765 = vmatpush1.bf16.msra.mxu0 %v721
    %766 = vmatprep.subr.bf16.mxu0 0
    %767 = vmatpush1.bf16.msra.mxu0 %v722
    %768 = vmatprep.subr.bf16.mxu0 0
    %769 = vmatpush1.bf16.msra.mxu0 %v723
    %770 = vmatprep.subr.bf16.mxu0 0
    %771 = vmatpush1.bf16.msra.mxu0 %v724
    %772 = vmatprep.subr.bf16.mxu0 0
    %773 = vmatpush1.bf16.msra.mxu0 %v725
    %774 = vmatprep.mubr.bf16.mxu0 %v613
    %775 = vmatmul.mubr.bf16.gmra.mrb[0].mxu0 %v612
    %v776 = vpop.f32.mrb[0].mxu0
    %v777 = vadd.f32 0.0, %v776
    %v778 = vpop.f32.mrb[0].mxu0
    %v779 = vpop.f32.mrb[0].mxu0
    %v780 = vpop.f32.mrb[0].mxu0
    %781 = vdwg.mxu0
    %v782 = vld [vmem:[#allocation2] sm:$0xff]
    %v783 = vadd.f32 %v782, %v777
    %784 = vst [vmem:[#allocation2] sm:$0xff] %v783
    %v785 = vld [vmem:[#allocation6 + $0x18] sm:$0xff]
    %v786 = vld [vmem:[#allocation6 + $0x38] sm:$0xff]
    %v787 = vld [vmem:[#allocation6 + $0x58] sm:$0xff]
    %v788 = vld [vmem:[#allocation6 + $0x78] sm:$0xff]
    %v793 = vunpack.c.l.b16 %v785
    %v794 = vunpack.c.h.b16 %v785
    %v795 = vunpack.c.l.b16 %v786
    %v796 = vunpack.c.h.b16 %v786
    %v797 = vunpack.c.l.b16 %v787
    %v798 = vunpack.c.h.b16 %v787
    %v799 = vunpack.c.l.b16 %v788
    %v800 = vunpack.c.h.b16 %v788
    %v801 = vpack.c.b16 %v795, %v793
    %v802 = vpack.c.b16 %v796, %v794
    %v803 = vpack.c.b16 %v799, %v797
    %v804 = vpack.c.b16 %v800, %v798
    %809 = vmatprep.subr.bf16.mxu0 %v802
    %810 = vmatpush1.bf16.msra.mxu0 %v801
    %811 = vmatprep.subr.bf16.mxu0 %v804
    %812 = vmatpush1.bf16.msra.mxu0 %v803
    %813 = vmatprep.subr.bf16.mxu0 0
    %814 = vmatpush1.bf16.msra.mxu0 0
    %815 = vmatprep.subr.bf16.mxu0 0
    %816 = vmatpush1.bf16.msra.mxu0 0
    %817 = vmatprep.subr.bf16.mxu0 0
    %818 = vmatpush1.bf16.msra.mxu0 0
    %819 = vmatprep.subr.bf16.mxu0 0
    %820 = vmatpush1.bf16.msra.mxu0 0
    %821 = vmatprep.subr.bf16.mxu0 0
    %822 = vmatpush1.bf16.msra.mxu0 0
    %823 = vmatprep.subr.bf16.mxu0 0
    %824 = vmatpush1.bf16.msra.mxu0 0
    %825 = vmatprep.subr.bf16.mxu0 0
    %826 = vmatpush1.bf16.msra.mxu0 0
    %827 = vmatprep.subr.bf16.mxu0 0
    %828 = vmatpush1.bf16.msra.mxu0 0
    %829 = vmatprep.subr.bf16.mxu0 0
    %830 = vmatpush1.bf16.msra.mxu0 0
    %831 = vmatprep.subr.bf16.mxu0 0
    %832 = vmatpush1.bf16.msra.mxu0 0
    %833 = vmatprep.subr.bf16.mxu0 0
    %834 = vmatpush1.bf16.msra.mxu0 0
    %835 = vmatprep.subr.bf16.mxu0 0
    %836 = vmatpush1.bf16.msra.mxu0 0
    %837 = vmatprep.subr.bf16.mxu0 0
    %838 = vmatpush1.bf16.msra.mxu0 0
    %839 = vmatprep.subr.bf16.mxu0 0
    %840 = vmatpush1.bf16.msra.mxu0 0
    %841 = vmatprep.mubr.bf16.mxu0 0
    %842 = vmatmul.mubr.bf16.gmra.mrb[0].mxu0 %v83
    %v843 = vpop.f32.mrb[0].mxu0
    %v844 = vadd.f32 0.0, %v843
    %v845 = vpop.f32.mrb[0].mxu0
    %v846 = vadd.f32 0.0, %v845
    %v847 = vpop.f32.mrb[0].mxu0
    %v848 = vpop.f32.mrb[0].mxu0
    %849 = vdwg.mxu0
    %v850 = vmul.f32 %v844, 0.01
    %v851 = vmul.f32 %v846, 0.01
    %v852 = vmax.f32 %v844, %v850
    %v853 = vmax.f32 %v846, %v851
    %v854 = vpack.c.bf16 %v852, %v852
    %v855 = vpack.c.bf16 %v853, %v853
    %v856 = vld [vmem:[#allocation8 + $0x180] sm:$0xf]
    %v857 = vld [vmem:[#allocation8 + $0x184] sm:$0xf]
    %v858 = vld [vmem:[#allocation8 + $0x188] sm:$0xf]
    %v859 = vld [vmem:[#allocation8 + $0x18c] sm:$0xf]
    %v860 = vld [vmem:[#allocation8 + $0x190] sm:$0xf]
    %v861 = vld [vmem:[#allocation8 + $0x194] sm:$0xf]
    %v862 = vld [vmem:[#allocation8 + $0x198] sm:$0xf]
    %v863 = vld [vmem:[#allocation8 + $0x19c] sm:$0xf]
    %v864 = vld [vmem:[#allocation8 + $0x1a0] sm:$0xf]
    %v865 = vld [vmem:[#allocation8 + $0x1a4] sm:$0xf]
    %v866 = vld [vmem:[#allocation8 + $0x1a8] sm:$0xf]
    %v867 = vld [vmem:[#allocation8 + $0x1ac] sm:$0xf]
    %v868 = vld [vmem:[#allocation8 + $0x1b0] sm:$0xf]
    %v869 = vld [vmem:[#allocation8 + $0x1b4] sm:$0xf]
    %v870 = vld [vmem:[#allocation8 + $0x1b8] sm:$0xf]
    %v871 = vld [vmem:[#allocation8 + $0x1bc] sm:$0xf]
    %v872 = vld [vmem:[#allocation8 + $0x1c0] sm:$0xf]
    %v873 = vld [vmem:[#allocation8 + $0x1c4] sm:$0xf]
    %v874 = vld [vmem:[#allocation8 + $0x1c8] sm:$0xf]
    %v875 = vld [vmem:[#allocation8 + $0x1cc] sm:$0xf]
    %v876 = vld [vmem:[#allocation8 + $0x1d0] sm:$0xf]
    %v877 = vld [vmem:[#allocation8 + $0x1d4] sm:$0xf]
    %v878 = vld [vmem:[#allocation8 + $0x1d8] sm:$0xf]
    %v879 = vld [vmem:[#allocation8 + $0x1dc] sm:$0xf]
    %v880 = vld [vmem:[#allocation8 + $0x1e0] sm:$0xf]
    %v881 = vld [vmem:[#allocation8 + $0x1e4] sm:$0xf]
    %v882 = vld [vmem:[#allocation8 + $0x1e8] sm:$0xf]
    %v883 = vld [vmem:[#allocation8 + $0x1ec] sm:$0xf]
    %v884 = vld [vmem:[#allocation8 + $0x1f0] sm:$0xf]
    %v885 = vld [vmem:[#allocation8 + $0x1f4] sm:$0xf]
    %v886 = vld [vmem:[#allocation8 + $0x1f8] sm:$0xf]
    %v887 = vld [vmem:[#allocation8 + $0x1fc] sm:$0xf]
    %v920 = vunpack.c.l.b16 %v856
    %v921 = vunpack.c.l.b16 %v857
    %v922 = vunpack.c.l.b16 %v858
    %v923 = vunpack.c.l.b16 %v859
    %v924 = vunpack.c.l.b16 %v860
    %v925 = vunpack.c.l.b16 %v861
    %v926 = vunpack.c.l.b16 %v862
    %v927 = vunpack.c.l.b16 %v863
    %v928 = vunpack.c.l.b16 %v864
    %v929 = vunpack.c.l.b16 %v865
    %v930 = vunpack.c.l.b16 %v866
    %v931 = vunpack.c.l.b16 %v867
    %v932 = vunpack.c.l.b16 %v868
    %v933 = vunpack.c.l.b16 %v869
    %v934 = vunpack.c.l.b16 %v870
    %v935 = vunpack.c.l.b16 %v871
    %v936 = vunpack.c.l.b16 %v872
    %v937 = vunpack.c.l.b16 %v873
    %v938 = vunpack.c.l.b16 %v874
    %v939 = vunpack.c.l.b16 %v875
    %v940 = vunpack.c.l.b16 %v876
    %v941 = vunpack.c.l.b16 %v877
    %v942 = vunpack.c.l.b16 %v878
    %v943 = vunpack.c.l.b16 %v879
    %v944 = vunpack.c.l.b16 %v880
    %v945 = vunpack.c.l.b16 %v881
    %v946 = vunpack.c.l.b16 %v882
    %v947 = vunpack.c.l.b16 %v883
    %v948 = vunpack.c.l.b16 %v884
    %v949 = vunpack.c.l.b16 %v885
    %v950 = vunpack.c.l.b16 %v886
    %v951 = vunpack.c.l.b16 %v887
    %v952 = vpack.c.b16 %v921, %v920
    %v953 = vpack.c.b16 %v923, %v922
    %v954 = vpack.c.b16 %v925, %v924
    %v955 = vpack.c.b16 %v927, %v926
    %v956 = vpack.c.b16 %v929, %v928
    %v957 = vpack.c.b16 %v931, %v930
    %v958 = vpack.c.b16 %v933, %v932
    %v959 = vpack.c.b16 %v935, %v934
    %v960 = vpack.c.b16 %v937, %v936
    %v961 = vpack.c.b16 %v939, %v938
    %v962 = vpack.c.b16 %v941, %v940
    %v963 = vpack.c.b16 %v943, %v942
    %v964 = vpack.c.b16 %v945, %v944
    %v965 = vpack.c.b16 %v947, %v946
    %v966 = vpack.c.b16 %v949, %v948
    %v967 = vpack.c.b16 %v951, %v950
    %984 = vmatprep.subr.bf16.mxu0 0
    %985 = vmatpush1.bf16.msra.mxu0 %v952
    %986 = vmatprep.subr.bf16.mxu0 0
    %987 = vmatpush1.bf16.msra.mxu0 %v953
    %988 = vmatprep.subr.bf16.mxu0 0
    %989 = vmatpush1.bf16.msra.mxu0 %v954
    %990 = vmatprep.subr.bf16.mxu0 0
    %991 = vmatpush1.bf16.msra.mxu0 %v955
    %992 = vmatprep.subr.bf16.mxu0 0
    %993 = vmatpush1.bf16.msra.mxu0 %v956
    %994 = vmatprep.subr.bf16.mxu0 0
    %995 = vmatpush1.bf16.msra.mxu0 %v957
    %996 = vmatprep.subr.bf16.mxu0 0
    %997 = vmatpush1.bf16.msra.mxu0 %v958
    %998 = vmatprep.subr.bf16.mxu0 0
    %999 = vmatpush1.bf16.msra.mxu0 %v959
    %1000 = vmatprep.subr.bf16.mxu0 0
    %1001 = vmatpush1.bf16.msra.mxu0 %v960
    %1002 = vmatprep.subr.bf16.mxu0 0
    %1003 = vmatpush1.bf16.msra.mxu0 %v961
    %1004 = vmatprep.subr.bf16.mxu0 0
    %1005 = vmatpush1.bf16.msra.mxu0 %v962
    %1006 = vmatprep.subr.bf16.mxu0 0
    %1007 = vmatpush1.bf16.msra.mxu0 %v963
    %1008 = vmatprep.subr.bf16.mxu0 0
    %1009 = vmatpush1.bf16.msra.mxu0 %v964
    %1010 = vmatprep.subr.bf16.mxu0 0
    %1011 = vmatpush1.bf16.msra.mxu0 %v965
    %1012 = vmatprep.subr.bf16.mxu0 0
    %1013 = vmatpush1.bf16.msra.mxu0 %v966
    %1014 = vmatprep.subr.bf16.mxu0 0
    %1015 = vmatpush1.bf16.msra.mxu0 %v967
    %1016 = vmatprep.mubr.bf16.mxu0 %v855
    %1017 = vmatmul.mubr.bf16.gmra.mrb[0].mxu0 %v854
    %v1018 = vpop.f32.mrb[0].mxu0
    %v1019 = vadd.f32 0.0, %v1018
    %v1020 = vpop.f32.mrb[0].mxu0
    %v1021 = vpop.f32.mrb[0].mxu0
    %v1022 = vpop.f32.mrb[0].mxu0
    %1023 = vdwg.mxu0
    %v1024 = vld [vmem:[#allocation2] sm:$0xff]
    %v1025 = vadd.f32 %v1024, %v1019
    %1026 = vst [vmem:[#allocation2] sm:$0xff] %v1025
    %v1027 = vld [vmem:[#allocation2] sm:$0xff]
    %1028 = vst [vmem:[#allocation9] sm:$0xff] %v1027
    // Predicated region
    $region26: #{small_homo_classifier2_forward.1} parent=1 // pred_check
      _
    $region27: #{small_homo_classifier2_forward.1} parent=1 // pred_check_branch
      %1030 = sbr.rel (0) target = $region29
    $region28: #{small_homo_classifier2_forward.1} parent=1 // pred_region
      %s1032 = ssub.s32 128, 128
      %1033 = vsyncadd [#allocation5], %s1032
      %s1035 = sshll.u32 [#allocation9], 4
      %s1036 = int_to_ptr.vmem [resolvable:$true] %s1035
      %1038 = dma.vmem_to_hbm [thread:$0]  %s1036, 128, %s3, [#allocation5]
    $region29: #{small_homo_classifier2_forward.1} parent=1 // pred_fallthru
      _
    // Predicated region
    $region30: #{small_homo_classifier2_forward.1} parent=1 // pred_check
      _
    $region31: #{small_homo_classifier2_forward.1} parent=1 // pred_check_branch
      %1040 = sbr.rel (0) target = $region33
    $region32: #{small_homo_classifier2_forward.1} parent=1 // pred_region
      %1041 = dma.done [#allocation5], 128
    $region33: #{small_homo_classifier2_forward.1} parent=1 // pred_fallthru
      _
    %1042 = vsyncpa [#allocation4], 1
    %1043 = vsyncpa [#allocation7], 1
    %1044 = vsyncpa [#allocation5], 1

</llo_original>
